<compile_context>
chip_gen: v7x
topology: tpu7x:2x2x1
jax: 0.10.0
libtpu: 0.0.40
codegen_flags: <defaults>
</compile_context>

<pallas_src>
import functools

import jax
import jax.numpy as jnp
from jax.experimental import pallas as pl
from jax.experimental.pallas import tpu as pltpu


_NEG_LARGE = -1e30   # finite "-inf" for masked (padded) class columns
_EPS = 1e-12         # matches F.normalize eps


def _round_up(x, m):
    return ((x + m - 1) // m) * m


def _arcface_kernel(f_ref, wt_ref, lbl_ref, out_ref,
                    fnorm_sc, m_sc, l_sc, tgt_sc,
                    *, margin_scale, num_classes, mask_classes):
    j = pl.program_id(1)
    nj = pl.num_programs(1)

    # ---- once per batch tile (first class tile): normalize features, init LSE state ----
    @pl.when(j == 0)
    def _():
        f = f_ref[...].astype(jnp.float32)                          # (TB, D)
        inv = jax.lax.rsqrt(
            jnp.maximum(jnp.sum(f * f, axis=1, keepdims=True), _EPS * _EPS))
        fnorm_sc[...] = (f * inv).astype(fnorm_sc.dtype)            # bf16 MXU operand
        m_sc[...] = jnp.full_like(m_sc, -jnp.inf)
        l_sc[...] = jnp.zeros_like(l_sc)
        tgt_sc[...] = jnp.zeros_like(tgt_sc)

    # ---- MXU: wt_ref is pre-normalized, pre-scaled, pre-transposed (D, TC) bf16,
    # so this dot directly yields scale * cos_theta (f32 accumulation). ----
    s_cos = jnp.dot(fnorm_sc[...], wt_ref[...],
                    preferred_element_type=jnp.float32)             # (TB, TC)

    tb, tc = s_cos.shape
    labels = lbl_ref[...]                                           # (TB, 1) i32
    class_ids = j * tc + jax.lax.broadcasted_iota(jnp.int32, (tb, tc), 1)
    is_target = class_ids == labels                                 # (TB, TC)

    # Additive margin on the target column: logits = s*cos - (margin*scale)*one_hot.
    logits = s_cos - jnp.where(is_target, jnp.float32(margin_scale), 0.0)
    if mask_classes:
        # Only traced when the class axis carries padding (c_pad != num_classes).
        logits = jnp.where(class_ids < num_classes, logits, jnp.float32(_NEG_LARGE))

    # ---- online (flash-style) logsumexp across class tiles ----
    m_prev = m_sc[...]
    m_new = jnp.maximum(m_prev, jnp.max(logits, axis=1, keepdims=True))
    alpha = jnp.exp(m_prev - m_new)
    p = jnp.exp(logits - m_new)
    l_sc[...] = alpha * l_sc[...] + jnp.sum(p, axis=1, keepdims=True)
    tgt_sc[...] += jnp.sum(jnp.where(is_target, logits, 0.0), axis=1, keepdims=True)
    m_sc[...] = m_new

    # ---- last class tile: per-example cross-entropy ----
    @pl.when(j == nj - 1)
    def _():
        out_ref[...] = m_sc[...] + jnp.log(l_sc[...]) - tgt_sc[...]


def prepare_arcface_weight(weight, *, scale=64.0, block_c=2048):
    """One-time parameter prep (hoisted out of the per-call path).

    f32 row-normalize, fold `scale` in, transpose to (D, C), pad to
    (d_pad, c_pad), cast to bf16 for the MXU.
    """
    C, D = weight.shape
    w = weight.astype(jnp.float32)
    inv = jax.lax.rsqrt(jnp.maximum(jnp.sum(w * w, axis=1, keepdims=True),
                                    _EPS * _EPS))
    w_t = (w * (inv * float(scale))).T                              # (D, C) f32
    d_pad = _round_up(D, 128)
    tc = min(block_c, _round_up(C, 128))
    c_pad = _round_up(C, tc)
    if (d_pad, c_pad) != (D, C):
        w_t = jnp.zeros((d_pad, c_pad), jnp.float32).at[:D, :C].set(w_t)
    return w_t.astype(jnp.bfloat16)


@functools.partial(
    jax.jit,
    static_argnames=("num_classes", "margin", "scale", "block_b", "block_c",
                     "vmem_limit_mb"))
def arcface_loss_prepared(features, labels, w_t, *, num_classes,
                          margin=0.5, scale=64.0, block_b=512, block_c=2048,
                          vmem_limit_mb=32):
    """features: (B, D) float, labels: (B,) int, w_t: prepared (d_pad, c_pad) bf16."""
    B, D = features.shape
    d_pad, c_pad = w_t.shape
    assert d_pad == _round_up(D, 128)
    assert block_c % 128 == 0

    tb = min(block_b, _round_up(B, 8))          # sublane-aligned batch tile
    tc = min(block_c, c_pad)                    # lane-aligned class tile
    b_pad = _round_up(B, tb)

    # Features kept f32 (small stream, better accuracy); pad only if needed.
    f_p = features.astype(jnp.float32)
    if (b_pad, d_pad) != (B, D):
        f_p = jnp.zeros((b_pad, d_pad), jnp.float32).at[:B, :D].set(f_p)
    l_p = labels.astype(jnp.int32).reshape(B, 1)
    if b_pad != B:
        l_p = jnp.zeros((b_pad, 1), jnp.int32).at[:B].set(l_p)

    kernel = functools.partial(
        _arcface_kernel,
        margin_scale=float(margin) * float(scale),
        num_classes=num_classes,
        mask_classes=(c_pad != num_classes))

    grid = (b_pad // tb, c_pad // tc)
    per_example = pl.pallas_call(
        kernel,
        out_shape=jax.ShapeDtypeStruct((b_pad, 1), jnp.float32),
        grid_spec=pltpu.PrefetchScalarGridSpec(
            num_scalar_prefetch=0,
            grid=grid,
            in_specs=[
                pl.BlockSpec((tb, d_pad), lambda i, j: (i, 0)),   # features (resident over j)
                pl.BlockSpec((d_pad, tc), lambda i, j: (0, j)),   # prepped weight.T (streamed)
                pl.BlockSpec((tb, 1), lambda i, j: (i, 0)),       # labels
            ],
            out_specs=pl.BlockSpec((tb, 1), lambda i, j: (i, 0)),
            scratch_shapes=[
                pltpu.VMEM((tb, d_pad), jnp.bfloat16),   # normalized features
                pltpu.VMEM((tb, 1), jnp.float32),        # running max
                pltpu.VMEM((tb, 1), jnp.float32),        # running sum of exp
                pltpu.VMEM((tb, 1), jnp.float32),        # target logit
            ],
        ),
        compiler_params=pltpu.CompilerParams(
            dimension_semantics=("parallel", "arbitrary"),
            vmem_limit_bytes=vmem_limit_mb * 1024 * 1024,
        ),
    )(f_p, w_t, l_p)

    # Mean over the real batch rows (padded rows discarded).
    return jnp.mean(per_example[:B, 0])


def arcface_loss(features, weight, labels, *, margin=0.5, scale=64.0,
                 block_b=512, block_c=2048):
    """Convenience wrapper taking the raw (C, D) weight (preps it on the fly)."""
    w_t = prepare_arcface_weight(weight, scale=scale, block_c=block_c)
    return arcface_loss_prepared(features, labels, w_t,
                                 num_classes=weight.shape[0],
                                 margin=margin, scale=scale,
                                 block_b=block_b, block_c=block_c)


def xavier_uniform(key, shape, dtype=jnp.float32):
    # matches nn.init.xavier_uniform_ for a 2D (fan_out, fan_in) weight
    fan_out, fan_in = shape
    limit = (6.0 / (fan_in + fan_out)) ** 0.5
    return jax.random.uniform(key, shape, dtype=dtype, minval=-limit, maxval=limit)


if __name__ == "__main__":
    feature_dim = 32
    num_classes = 16
    batch = 8
    margin, scale = 0.5, 64.0

    key = jax.random.PRNGKey(0)
    k_feat, k_w, k_lbl = jax.random.split(key, 3)

    features = jax.random.normal(k_feat, (batch, feature_dim), dtype=jnp.float32)
    weight = xavier_uniform(k_w, (num_classes, feature_dim))
    labels = jax.random.randint(k_lbl, (batch,), 0, num_classes, dtype=jnp.int32)

    # One-time weight prep (normalize + scale + transpose + pad + bf16 cast).
    w_t = prepare_arcface_weight(weight, scale=scale)
    loss = arcface_loss_prepared(features, labels, w_t, num_classes=num_classes,
                                 margin=margin, scale=scale)
    jax.block_until_ready(loss)

    # Pure f32 JAX reference (same math as the PyTorch module's forward).
    fn = features / jnp.maximum(
        jnp.linalg.norm(features, axis=1, keepdims=True), 1e-12)
    wn = weight / jnp.maximum(
        jnp.linalg.norm(weight, axis=1, keepdims=True), 1e-12)
    cos = fn @ wn.T
    oh = jax.nn.one_hot(labels, num_classes, dtype=jnp.float32)
    logits = (cos - oh * margin) * scale
    ref = jnp.mean(
        jax.nn.logsumexp(logits, axis=1) - jnp.sum(logits * oh, axis=1))

    # bf16 MXU operands (f32 accumulation) vs. full-f32 reference -> relaxed tolerance.
    assert jnp.allclose(loss, ref, rtol=2e-2, atol=2e-1), (loss, ref)

    print("KERNEL_OK")
</pallas_src>

<mosaic_0001>
module attributes {stable_mosaic.version = 11 : i64} {
  func.func @_arcface_kernel(%arg0: i32, %arg1: i32, %arg2: memref<8x128xf32, #tpu.memory_space<vmem>>, %arg3: memref<128x128xbf16, #tpu.memory_space<vmem>>, %arg4: memref<8x1xi32, #tpu.memory_space<vmem>>, %arg5: memref<8x1xf32, #tpu.memory_space<vmem>>, %arg6: memref<8x128xbf16, #tpu.memory_space<vmem>>, %arg7: memref<8x1xf32, #tpu.memory_space<vmem>>, %arg8: memref<8x1xf32, #tpu.memory_space<vmem>>, %arg9: memref<8x1xf32, #tpu.memory_space<vmem>>) attributes {dimension_semantics = [#tpu.dimension_semantics<parallel>, #tpu.dimension_semantics<arbitrary>], iteration_bounds = array<i64: 1, 1>, scalar_prefetch = 0 : i64, scratch_operands = 4 : i64, tpu.core_type = #tpu.core_type<tc>, window_params = [{transform_indices = @transform_0, window_bounds = array<i64: 8, 128>}, {transform_indices = @transform_1, window_bounds = array<i64: 128, 128>}, {transform_indices = @transform_2, window_bounds = array<i64: 8, 1>}, {transform_indices = @transform_3, window_bounds = array<i64: 8, 1>}]} {
    %c0_i32 = arith.constant 0 : i32
    %0 = arith.cmpi eq, %arg1, %c0_i32 : i32
    %1 = arith.extui %0 : i1 to i32
    %c0_i32_0 = arith.constant 0 : i32
    %2 = arith.cmpi ne, %1, %c0_i32_0 : i32
    scf.if %2 {
      %c0_27 = arith.constant 0 : index
      %c0_28 = arith.constant 0 : index
      %47 = vector.load %arg2[%c0_27, %c0_28] : memref<8x128xf32, #tpu.memory_space<vmem>>, vector<8x128xf32>
      %48 = arith.mulf %47, %47 : vector<8x128xf32>
      %cst_29 = arith.constant dense<0.000000e+00> : vector<8xf32>
      %49 = vector.multi_reduction <add>, %48, %cst_29 [1] : vector<8x128xf32> to vector<8xf32>
      %50 = vector.shape_cast %49 : vector<8xf32> to vector<8x1xf32>
      %cst_30 = arith.constant 1.000000e-24 : f32
      %51 = vector.broadcast %cst_30 : f32 to vector<8x1xf32>
      %52 = arith.maximumf %50, %51 : vector<8x1xf32>
      %53 = math.rsqrt %52 : vector<8x1xf32>
      %54 = vector.broadcast %53 : vector<8x1xf32> to vector<8x128xf32>
      %55 = arith.mulf %47, %54 : vector<8x128xf32>
      %56 = arith.truncf %55 : vector<8x128xf32> to vector<8x128xbf16>
      %c0_31 = arith.constant 0 : index
      %c0_32 = arith.constant 0 : index
      %57 = vector.load %arg6[%c0_31, %c0_32] : memref<8x128xbf16, #tpu.memory_space<vmem>>, vector<8x128xbf16>
      tpu.vector_store %arg6[%c0_31, %c0_32], %56 {strides = array<i32>} : memref<8x128xbf16, #tpu.memory_space<vmem>>, vector<8x128xbf16>,
      %cst_33 = arith.constant 0xFF800000 : f32
      %58 = vector.broadcast %cst_33 : f32 to vector<8x1xf32>
      %c0_34 = arith.constant 0 : index
      %c0_35 = arith.constant 0 : index
      %59 = vector.load %arg7[%c0_34, %c0_35] : memref<8x1xf32, #tpu.memory_space<vmem>>, vector<8x1xf32>
      tpu.vector_store %arg7[%c0_34, %c0_35], %58 {strides = array<i32>} : memref<8x1xf32, #tpu.memory_space<vmem>>, vector<8x1xf32>,
      %cst_36 = arith.constant 0.000000e+00 : f32
      %60 = vector.broadcast %cst_36 : f32 to vector<8x1xf32>
      %c0_37 = arith.constant 0 : index
      %c0_38 = arith.constant 0 : index
      %61 = vector.load %arg8[%c0_37, %c0_38] : memref<8x1xf32, #tpu.memory_space<vmem>>, vector<8x1xf32>
      tpu.vector_store %arg8[%c0_37, %c0_38], %60 {strides = array<i32>} : memref<8x1xf32, #tpu.memory_space<vmem>>, vector<8x1xf32>,
      %cst_39 = arith.constant 0.000000e+00 : f32
      %62 = vector.broadcast %cst_39 : f32 to vector<8x1xf32>
      %c0_40 = arith.constant 0 : index
      %c0_41 = arith.constant 0 : index
      %63 = vector.load %arg9[%c0_40, %c0_41] : memref<8x1xf32, #tpu.memory_space<vmem>>, vector<8x1xf32>
      tpu.vector_store %arg9[%c0_40, %c0_41], %62 {strides = array<i32>} : memref<8x1xf32, #tpu.memory_space<vmem>>, vector<8x1xf32>,
    } else {
    }
    %c0 = arith.constant 0 : index
    %c0_1 = arith.constant 0 : index
    %3 = vector.load %arg6[%c0, %c0_1] : memref<8x128xbf16, #tpu.memory_space<vmem>>, vector<8x128xbf16>
    %c0_2 = arith.constant 0 : index
    %c0_3 = arith.constant 0 : index
    %4 = vector.load %arg3[%c0_2, %c0_3] : memref<128x128xbf16, #tpu.memory_space<vmem>>, vector<128x128xbf16>
    %cst = arith.constant dense<0.000000e+00> : vector<8x128xf32>
    %5 = tpu.matmul %3, %4, %cst {dimension_numbers = #tpu.dot_dimension_numbers<[1], [0], [0], [1], [0, 0, 1, 1], [], []>} : vector<8x128xbf16>, vector<128x128xbf16>, vector<8x128xf32> -> vector<8x128xf32>
    %c0_4 = arith.constant 0 : index
    %c0_5 = arith.constant 0 : index
    %6 = vector.load %arg4[%c0_4, %c0_5] : memref<8x1xi32, #tpu.memory_space<vmem>>, vector<8x1xi32>
    %c128_i32 = arith.constant 128 : i32
    %7 = arith.muli %arg1, %c128_i32 : i32
    %8 = tpu.iota {dimensions = array<i32: 1>} : vector<8x128xi32>
    %9 = vector.broadcast %7 : i32 to vector<8x128xi32>
    %10 = arith.addi %9, %8 : vector<8x128xi32>
    %11 = vector.broadcast %6 : vector<8x1xi32> to vector<8x128xi32>
    %12 = arith.cmpi eq, %10, %11 : vector<8x128xi32>
    %cst_6 = arith.constant 3.200000e+01 : f32
    %cst_7 = arith.constant 0.000000e+00 : f32
    %13 = vector.broadcast %cst_6 : f32 to vector<8x128xf32>
    %14 = vector.broadcast %cst_7 : f32 to vector<8x128xf32>
    %15 = arith.select %12, %13, %14 : vector<8x128xi1>, vector<8x128xf32>
    %16 = arith.subf %5, %15 : vector<8x128xf32>
    %c16_i32 = arith.constant 16 : i32
    %17 = vector.broadcast %c16_i32 : i32 to vector<8x128xi32>
    %18 = arith.cmpi slt, %10, %17 : vector<8x128xi32>
    %cst_8 = arith.constant -1.000000e+30 : f32
    %19 = vector.broadcast %cst_8 : f32 to vector<8x128xf32>
    %20 = arith.select %18, %16, %19 : vector<8x128xi1>, vector<8x128xf32>
    %c0_9 = arith.constant 0 : index
    %c0_10 = arith.constant 0 : index
    %21 = vector.load %arg7[%c0_9, %c0_10] : memref<8x1xf32, #tpu.memory_space<vmem>>, vector<8x1xf32>
    %cst_11 = arith.constant dense<0xFF800000> : vector<8xf32>
    %22 = vector.multi_reduction <maximumf>, %20, %cst_11 [1] : vector<8x128xf32> to vector<8xf32>
    %23 = vector.shape_cast %22 : vector<8xf32> to vector<8x1xf32>
    %24 = arith.maximumf %21, %23 : vector<8x1xf32>
    %25 = arith.subf %21, %24 : vector<8x1xf32>
    %26 = math.exp %25 : vector<8x1xf32>
    %27 = vector.broadcast %24 : vector<8x1xf32> to vector<8x128xf32>
    %28 = arith.subf %20, %27 : vector<8x128xf32>
    %29 = math.exp %28 : vector<8x128xf32>
    %c0_12 = arith.constant 0 : index
    %c0_13 = arith.constant 0 : index
    %30 = vector.load %arg8[%c0_12, %c0_13] : memref<8x1xf32, #tpu.memory_space<vmem>>, vector<8x1xf32>
    %31 = arith.mulf %26, %30 : vector<8x1xf32>
    %cst_14 = arith.constant dense<0.000000e+00> : vector<8xf32>
    %32 = vector.multi_reduction <add>, %29, %cst_14 [1] : vector<8x128xf32> to vector<8xf32>
    %33 = vector.shape_cast %32 : vector<8xf32> to vector<8x1xf32>
    %34 = arith.addf %31, %33 : vector<8x1xf32>
    %c0_15 = arith.constant 0 : index
    %c0_16 = arith.constant 0 : index
    %35 = vector.load %arg8[%c0_15, %c0_16] : memref<8x1xf32, #tpu.memory_space<vmem>>, vector<8x1xf32>
    tpu.vector_store %arg8[%c0_15, %c0_16], %34 {strides = array<i32>} : memref<8x1xf32, #tpu.memory_space<vmem>>, vector<8x1xf32>,
    %c0_17 = arith.constant 0 : index
    %c0_18 = arith.constant 0 : index
    %36 = vector.load %arg9[%c0_17, %c0_18] : memref<8x1xf32, #tpu.memory_space<vmem>>, vector<8x1xf32>
    %cst_19 = arith.constant 0.000000e+00 : f32
    %37 = vector.broadcast %cst_19 : f32 to vector<8x128xf32>
    %38 = arith.select %12, %20, %37 : vector<8x128xi1>, vector<8x128xf32>
    %cst_20 = arith.constant dense<0.000000e+00> : vector<8xf32>
    %39 = vector.multi_reduction <add>, %38, %cst_20 [1] : vector<8x128xf32> to vector<8xf32>
    %40 = vector.shape_cast %39 : vector<8xf32> to vector<8x1xf32>
    %41 = arith.addf %36, %40 : vector<8x1xf32>
    %c0_21 = arith.constant 0 : index
    %c0_22 = arith.constant 0 : index
    %42 = vector.load %arg9[%c0_21, %c0_22] : memref<8x1xf32, #tpu.memory_space<vmem>>, vector<8x1xf32>
    tpu.vector_store %arg9[%c0_21, %c0_22], %41 {strides = array<i32>} : memref<8x1xf32, #tpu.memory_space<vmem>>, vector<8x1xf32>,
    %c0_23 = arith.constant 0 : index
    %c0_24 = arith.constant 0 : index
    %43 = vector.load %arg7[%c0_23, %c0_24] : memref<8x1xf32, #tpu.memory_space<vmem>>, vector<8x1xf32>
    tpu.vector_store %arg7[%c0_23, %c0_24], %24 {strides = array<i32>} : memref<8x1xf32, #tpu.memory_space<vmem>>, vector<8x1xf32>,
    %c0_i32_25 = arith.constant 0 : i32
    %44 = arith.cmpi eq, %arg1, %c0_i32_25 : i32
    %45 = arith.extui %44 : i1 to i32
    %c0_i32_26 = arith.constant 0 : i32
    %46 = arith.cmpi ne, %45, %c0_i32_26 : i32
    scf.if %46 {
      %c0_27 = arith.constant 0 : index
      %c0_28 = arith.constant 0 : index
      %47 = vector.load %arg7[%c0_27, %c0_28] : memref<8x1xf32, #tpu.memory_space<vmem>>, vector<8x1xf32>
      %c0_29 = arith.constant 0 : index
      %c0_30 = arith.constant 0 : index
      %48 = vector.load %arg8[%c0_29, %c0_30] : memref<8x1xf32, #tpu.memory_space<vmem>>, vector<8x1xf32>
      %49 = math.log %48 : vector<8x1xf32>
      %50 = arith.addf %47, %49 : vector<8x1xf32>
      %c0_31 = arith.constant 0 : index
      %c0_32 = arith.constant 0 : index
      %51 = vector.load %arg9[%c0_31, %c0_32] : memref<8x1xf32, #tpu.memory_space<vmem>>, vector<8x1xf32>
      %52 = arith.subf %50, %51 : vector<8x1xf32>
      %c0_33 = arith.constant 0 : index
      %c0_34 = arith.constant 0 : index
      %53 = vector.load %arg5[%c0_33, %c0_34] : memref<8x1xf32, #tpu.memory_space<vmem>>, vector<8x1xf32>
      tpu.vector_store %arg5[%c0_33, %c0_34], %52 {strides = array<i32>} : memref<8x1xf32, #tpu.memory_space<vmem>>, vector<8x1xf32>,
    } else {
    }
    return
  }
  func.func @transform_0(%arg0: i32, %arg1: i32) -> (i32, i32) {
    %c0_i32 = arith.constant 0 : i32
    %c0_i32_0 = arith.constant 0 : i32
    return %arg0, %c0_i32 : i32, i32
  }
  func.func @transform_1(%arg0: i32, %arg1: i32) -> (i32, i32) {
    %c0_i32 = arith.constant 0 : i32
    %c0_i32_0 = arith.constant 0 : i32
    return %c0_i32, %arg1 : i32, i32
  }
  func.func @transform_2(%arg0: i32, %arg1: i32) -> (i32, i32) {
    %c0_i32 = arith.constant 0 : i32
    %c0_i32_0 = arith.constant 0 : i32
    return %arg0, %c0_i32 : i32, i32
  }
  func.func @transform_3(%arg0: i32, %arg1: i32) -> (i32, i32) {
    %c0_i32 = arith.constant 0 : i32
    %c0_i32_0 = arith.constant 0 : i32
    return %arg0, %c0_i32 : i32, i32
  }
}

</mosaic_0001>

<llo_original>
// kernel: arcface_loss_prepared.1
$region0: #{arcface_loss_prepared.1}
  #allocation0 [shape = 'u32[]', space=smem, size = 0x4, offset = 0x4, fixed_abs, tag = 'smem constant byte address 0x4 - core index']
  #allocation1 [shape = 'u32[144,128]{1,0:T(1,128)}', space=vmem, size = 0x12000, scoped, tag = 'internal scratch']
  #allocation2 [shape = 'bf16[8,128]{1,0:T(8,128)(2,1)}', space=vmem, size = 0x800, scoped, tag = 'scratch operand']
  #allocation3 [shape = 'f32[8,1]{1,0:T(8,128)}', space=vmem, size = 0x1000, scoped, tag = 'scratch operand']
  #allocation4 [shape = 'f32[8,1]{1,0:T(8,128)}', space=vmem, size = 0x1000, scoped, tag = 'scratch operand']
  #allocation5 [shape = 'f32[8,1]{1,0:T(8,128)}', space=vmem, size = 0x1000, scoped, tag = 'scratch operand']
  %s0 = inlined_call_operand.vmem [shape: f32[8,128], index: 0, kind: input, shape index: {}]
  %s1 = inlined_call_operand.hbm [shape: bf16[128,128], index: 1, kind: input, shape index: {}]
  %s2 = inlined_call_operand.vmem [shape: s32[8,1], index: 2, kind: input, shape index: {}]
  %s3 = inlined_call_operand.vmem [shape: f32[8,1], index: 3, kind: output, shape index: {}]
  %s4 = sld [smem:[#allocation0]]
  $region34: #{arcface_loss_prepared.1} parent=0
    _
  %s6 = ssub.s32 1, %s4
  %s7 = scalar_select 0, %s6, %s4
  $region1: #{arcface_loss_prepared.1} parent=0
    #allocation6 [shape = 'u8[32768]{0}', space=vmem, size = 0x8000, scoped, tag = 'input window, operand 1, single buffered']
    #allocation7 [shape = 's32[1]{0}', space=sflag, size = 0x4, scoped, tag = 'scoped memory for arcface_loss_prepared.1']
    %8 = vsyncpa [#allocation7], 0
    // Predicated region
    $region2: #{arcface_loss_prepared.1} parent=1 // pred_check
      _
    $region3: #{arcface_loss_prepared.1} parent=1 // pred_check_branch
      %10 = sbr.rel (0) target = $region5
    $region4: #{arcface_loss_prepared.1} parent=1 // pred_region
      _
    $region5: #{arcface_loss_prepared.1} parent=1 // pred_fallthru
      _
    // Predicated region
    $region6: #{arcface_loss_prepared.1} parent=1 // pred_check
      _
    $region7: #{arcface_loss_prepared.1} parent=1 // pred_check_branch
      %12 = sbr.rel (0) target = $region9
    $region8: #{arcface_loss_prepared.1} parent=1 // pred_region
      %s14 = ssub.s32 1024, 1024
      %15 = vsyncadd [#allocation7], %s14
      %s16 = sshll.u32 [#allocation6], 4
      %s17 = int_to_ptr.vmem [resolvable:$true] %s16
      %22 = dma.hbm_to_vmem [thread:$0]  %s1, 1024, %s17, [#allocation7], 64, 64, 4
    $region9: #{arcface_loss_prepared.1} parent=1 // pred_fallthru
      _
    // Predicated region
    $region10: #{arcface_loss_prepared.1} parent=1 // pred_check
      _
    $region11: #{arcface_loss_prepared.1} parent=1 // pred_check_branch
      %24 = sbr.rel (0) target = $region13
    $region12: #{arcface_loss_prepared.1} parent=1 // pred_region
      _
    $region13: #{arcface_loss_prepared.1} parent=1 // pred_fallthru
      _
    // Predicated region
    $region14: #{arcface_loss_prepared.1} parent=1 // pred_check
      _
    $region15: #{arcface_loss_prepared.1} parent=1 // pred_check_branch
      %26 = sbr.rel (0) target = $region17
    $region16: #{arcface_loss_prepared.1} parent=1 // pred_region
      %27 = dma.done [#allocation7], 1024
    $region17: #{arcface_loss_prepared.1} parent=1 // pred_fallthru
      _
    %p29 = scmp.eq.s32.totalorder 0, 0
    // Predicated region
    $region18: #{arcface_loss_prepared.1} parent=1 // pred_check
      %p30 = pneg %p29
    $region19: #{arcface_loss_prepared.1} parent=1 // pred_check_branch
      %32 = sbr.rel (%p30) target = $region21
    $region20: #{arcface_loss_prepared.1} parent=1 // pred_region
      %v33 = vld [vmem:[%s0] sm:$0xff]
      %v34 = vmul.f32 %v33, %v33
      %35 = vadd.xlane.f32.xlu0 %v34
      %v36 = vpop.xlane.xlu0 %35
      %v37 = vmax.f32 %v36, 1e-24
      %v38 = vrsqrt.pop %v37
      %v39 = vmul.f32 %v33, %v38
      %v40 = vpack.c.bf16 %v39, %v39
      %41 = vst [vmem:[#allocation2] sm:$0xf] %v40
      %vm42 = vcmask 7168
      %43 = vst.msk [vmem:[#allocation3] sm:$0xff] %vm42, -inf
      %44 = vst.msk [vmem:[#allocation4] sm:$0xff] %vm42, 0.0
      %45 = vst.msk [vmem:[#allocation5] sm:$0xff] %vm42, 0.0
    $region21: #{arcface_loss_prepared.1} parent=1 // pred_fallthru
      _
    %v46 = vld [vmem:[#allocation2] sm:$0xf]
    %v47 = vld [vmem:[#allocation6] sm:$0xf]
    %v48 = vld [vmem:[#allocation6 + $0x4] sm:$0xf]
    %v49 = vld [vmem:[#allocation6 + $0x8] sm:$0xf]
    %v50 = vld [vmem:[#allocation6 + $0xc] sm:$0xf]
    %v51 = vld [vmem:[#allocation6 + $0x10] sm:$0xf]
    %v52 = vld [vmem:[#allocation6 + $0x14] sm:$0xf]
    %v53 = vld [vmem:[#allocation6 + $0x18] sm:$0xf]
    %v54 = vld [vmem:[#allocation6 + $0x1c] sm:$0xf]
    %v55 = vld [vmem:[#allocation6 + $0x20] sm:$0xf]
    %v56 = vld [vmem:[#allocation6 + $0x24] sm:$0xf]
    %v57 = vld [vmem:[#allocation6 + $0x28] sm:$0xf]
    %v58 = vld [vmem:[#allocation6 + $0x2c] sm:$0xf]
    %v59 = vld [vmem:[#allocation6 + $0x30] sm:$0xf]
    %v60 = vld [vmem:[#allocation6 + $0x34] sm:$0xf]
    %v61 = vld [vmem:[#allocation6 + $0x38] sm:$0xf]
    %v62 = vld [vmem:[#allocation6 + $0x3c] sm:$0xf]
    %v79 = vunpack.c.l.b16 %v47
    %v80 = vunpack.c.l.b16 %v48
    %v81 = vunpack.c.l.b16 %v49
    %v82 = vunpack.c.l.b16 %v50
    %v83 = vunpack.c.l.b16 %v51
    %v84 = vunpack.c.l.b16 %v52
    %v85 = vunpack.c.l.b16 %v53
    %v86 = vunpack.c.l.b16 %v54
    %v87 = vunpack.c.l.b16 %v55
    %v88 = vunpack.c.l.b16 %v56
    %v89 = vunpack.c.l.b16 %v57
    %v90 = vunpack.c.l.b16 %v58
    %v91 = vunpack.c.l.b16 %v59
    %v92 = vunpack.c.l.b16 %v60
    %v93 = vunpack.c.l.b16 %v61
    %v94 = vunpack.c.l.b16 %v62
    %v95 = vpack.c.b16 %v80, %v79
    %v96 = vpack.c.b16 %v82, %v81
    %v97 = vpack.c.b16 %v84, %v83
    %v98 = vpack.c.b16 %v86, %v85
    %v99 = vpack.c.b16 %v88, %v87
    %v100 = vpack.c.b16 %v90, %v89
    %v101 = vpack.c.b16 %v92, %v91
    %v102 = vpack.c.b16 %v94, %v93
    %111 = vmatprep.subr.bf16.mxu0 0
    %112 = vmatpush1.bf16.msra.mxu0 %v95
    %113 = vmatprep.subr.bf16.mxu0 0
    %114 = vmatpush1.bf16.msra.mxu0 %v96
    %115 = vmatprep.subr.bf16.mxu0 0
    %116 = vmatpush1.bf16.msra.mxu0 %v97
    %117 = vmatprep.subr.bf16.mxu0 0
    %118 = vmatpush1.bf16.msra.mxu0 %v98
    %119 = vmatprep.subr.bf16.mxu0 0
    %120 = vmatpush1.bf16.msra.mxu0 %v99
    %121 = vmatprep.subr.bf16.mxu0 0
    %122 = vmatpush1.bf16.msra.mxu0 %v100
    %123 = vmatprep.subr.bf16.mxu0 0
    %124 = vmatpush1.bf16.msra.mxu0 %v101
    %125 = vmatprep.subr.bf16.mxu0 0
    %126 = vmatpush1.bf16.msra.mxu0 %v102
    %127 = vmatprep.subr.bf16.mxu0 0
    %128 = vmatpush1.bf16.msra.mxu0 0
    %129 = vmatprep.subr.bf16.mxu0 0
    %130 = vmatpush1.bf16.msra.mxu0 0
    %131 = vmatprep.subr.bf16.mxu0 0
    %132 = vmatpush1.bf16.msra.mxu0 0
    %133 = vmatprep.subr.bf16.mxu0 0
    %134 = vmatpush1.bf16.msra.mxu0 0
    %135 = vmatprep.subr.bf16.mxu0 0
    %136 = vmatpush1.bf16.msra.mxu0 0
    %137 = vmatprep.subr.bf16.mxu0 0
    %138 = vmatpush1.bf16.msra.mxu0 0
    %139 = vmatprep.subr.bf16.mxu0 0
    %140 = vmatpush1.bf16.msra.mxu0 0
    %141 = vmatprep.subr.bf16.mxu0 0
    %142 = vmatpush1.bf16.msra.mxu0 0
    %143 = vmatprep.mubr.bf16.mxu0 0
    %144 = vmatmul.mubr.bf16.gmra.mrb[0].mxu0 %v46
    %v145 = vpop.f32.mrb[0].mxu0
    %v146 = vadd.f32 0.0, %v145
    %v147 = vpop.f32.mrb[0].mxu0
    %v148 = vpop.f32.mrb[0].mxu0
    %v149 = vpop.f32.mrb[0].mxu0
    %150 = vdwg.mxu0
    %v151 = vld [vmem:[%s2] sm:$0xff]
    %s152 = smul.u32 0, 128
    %v153 = vlaneseq
    %v154 = vand.u32 %v153, 127
    %v155 = vstv %s152
    %v156 = vadd.s32 %v155, %v154
    %157 = vset.pattern.permute.xlu0 0
    %158 = vperm.xlu0 %157, %v151
    %v159 = vpop.permute.xlu0 %158
    %vm160 = vcmp.eq.s32.totalorder %v156, %v159
    %v161 = vsel %vm160, 32.0, 0.0
    %v162 = vsub.f32 %v146, %v161
    %vm163 = vcmp.lt.s32.totalorder %v156, 16
    %v164 = vsel %vm163, %v162, -1e+30
    %v165 = vld [vmem:[#allocation3] sm:$0xff]
    %166 = vmax.xlane.f32.xlu0 %v164
    %v167 = vpop.xlane.xlu0 %166
    %v168 = vmax.f32 %v165, %v167
    %v169 = vsub.f32 %v165, %v168
    %v170 = vmul.f32 %v169, 1.442695
    %v171 = vpow.pop %v170
    %173 = vset.pattern.permute.xlu0 0
    %174 = vperm.xlu0 %173, %v168
    %v175 = vpop.permute.xlu0 %174
    %v177 = vsub.f32 %v164, %v175
    %v178 = vmul.f32 %v177, 1.442695
    %v179 = vpow.pop %v178
    %v180 = vld [vmem:[#allocation4] sm:$0xff]
    %v181 = vmul.f32 %v171, %v180
    %182 = vadd.xlane.f32.xlu0 %v179
    %v183 = vpop.xlane.xlu0 %182
    %v184 = vadd.f32 %v181, %v183
    %vm185 = vcmask 7168
    %186 = vst.msk [vmem:[#allocation4] sm:$0xff] %vm185, %v184
    %v187 = vld [vmem:[#allocation5] sm:$0xff]
    %v188 = vsel %vm160, %v164, 0.0
    %189 = vadd.xlane.f32.xlu0 %v188
    %v190 = vpop.xlane.xlu0 %189
    %v191 = vadd.f32 %v187, %v190
    %192 = vst.msk [vmem:[#allocation5] sm:$0xff] %vm185, %v191
    %193 = vst.msk [vmem:[#allocation3] sm:$0xff] %vm185, %v168
    // Predicated region
    $region22: #{arcface_loss_prepared.1} parent=1 // pred_check
      %p194 = pneg %p29
    $region23: #{arcface_loss_prepared.1} parent=1 // pred_check_branch
      %196 = sbr.rel (%p194) target = $region25
    $region24: #{arcface_loss_prepared.1} parent=1 // pred_region
      %v197 = vld [vmem:[#allocation3] sm:$0xff]
      %v198 = vld [vmem:[#allocation4] sm:$0xff]
      %v199 = vlog2.pop %v198
      %v200 = vmul.f32 %v199, 0.6931472
      %v201 = vadd.f32 %v197, %v200
      %v202 = vld [vmem:[#allocation5] sm:$0xff]
      %v203 = vsub.f32 %v201, %v202
      %204 = vst.msk [vmem:[%s3] sm:$0xff] %vm185, %v203
    $region25: #{arcface_loss_prepared.1} parent=1 // pred_fallthru
      _
    // Predicated region
    $region26: #{arcface_loss_prepared.1} parent=1 // pred_check
      _
    $region27: #{arcface_loss_prepared.1} parent=1 // pred_check_branch
      %206 = sbr.rel (0) target = $region29
    $region28: #{arcface_loss_prepared.1} parent=1 // pred_region
      _
    $region29: #{arcface_loss_prepared.1} parent=1 // pred_fallthru
      _
    // Predicated region
    $region30: #{arcface_loss_prepared.1} parent=1 // pred_check
      _
    $region31: #{arcface_loss_prepared.1} parent=1 // pred_check_branch
      %208 = sbr.rel (0) target = $region33
    $region32: #{arcface_loss_prepared.1} parent=1 // pred_region
      _
    $region33: #{arcface_loss_prepared.1} parent=1 // pred_fallthru
      _
    %209 = vsyncpa [#allocation7], 1

</llo_original>
